<compile_context>
chip_gen: v6e
topology: v6e:2x2x1
jax: 0.10.0
libtpu: 0.0.40
codegen_flags: <defaults>
</compile_context>

<pallas_src>
import functools

import jax
import jax.numpy as jnp
from jax.experimental import pallas as pl
from jax.experimental.pallas import tpu as pltpu


def _round_up(x, m):
    return ((x + m - 1) // m) * m


def char_rnn_chunk_kernel(x_ref, h0_ref, wih_ref, whh_ref, bih_ref, bhh_ref,
                          wdec_ref, bdec_ref, logits_ref, h_ref,
                          *, hidden_size, valid_steps, need_mask):
    """One chunk of timesteps per grid iteration (whole sequence if T<=64).

    Weights/biases and the carried hidden state are VMEM-resident; the inner
    unrolled fori_loop lets the scheduler overlap step t's decoder matmul and
    logits store with step t+1's gate matmuls.
    """
    H = hidden_size
    ts = x_ref.shape[0]                     # timesteps in this chunk (static)
    B_pad = x_ref.shape[1]
    c = pl.program_id(0)

    @pl.when(c == 0)
    def _():
        h_ref[...] = h0_ref[...]            # seed resident hidden state once

    # Resident weights / biases: loaded (and broadcast) once per chunk,
    # outside the step loop (JAX does not CSE broadcast_in_dim).
    wih = wih_ref[...]                      # (H, G_pad)  fused [r|z|n]
    whh = whh_ref[...]                      # (H, G_pad)
    wdec = wdec_ref[...]                    # (H, O_pad)
    bih = jnp.broadcast_to(bih_ref[...], (B_pad, wih.shape[1]))
    bhh = jnp.broadcast_to(bhh_ref[...], (B_pad, whh.shape[1]))
    bdec = jnp.broadcast_to(bdec_ref[...], (B_pad, wdec.shape[1]))

    def step(t, h):
        x = x_ref[t]                        # (B_pad, H) current timestep input
        # Two fused, lane-dense MXU matmuls instead of six per-gate ones.
        gi = jnp.dot(x, wih, preferred_element_type=jnp.float32) + bih
        gh = jnp.dot(h, whh, preferred_element_type=jnp.float32) + bhh
        # PyTorch GRU semantics (gate order r, z, n); b_hh_n already folded
        # into gh's n lanes, so it stays inside the r * (...) term.
        rz = jax.nn.sigmoid(gi[:, :2 * H] + gh[:, :2 * H])
        r = rz[:, :H]
        z = rz[:, H:2 * H]
        n = jnp.tanh(gi[:, 2 * H:3 * H] + r * gh[:, 2 * H:3 * H])
        h_new = (1.0 - z) * n + z * h       # (B_pad, H)
        if need_mask:                       # only when T was padded up to TS
            valid = (c * ts + t) < valid_steps
            h_new = jnp.where(valid, h_new, h)
        # decoder: logits_t = h_new @ W_dec^T + b_dec  (lane-dense O_pad)
        logits_ref[t] = (jnp.dot(h_new, wdec,
                                 preferred_element_type=jnp.float32) + bdec)
        return h_new

    h_final = jax.lax.fori_loop(0, ts, step, h_ref[...], unroll=True)
    h_ref[...] = h_final                    # stays resident; HBM writeback at end


def prepare_params(params):
    """One-time layout transforms (plain XLA, outside the hot path)."""
    H = params["embedding"].shape[1]
    O = params["w_dec"].shape[0]
    G = 3 * H
    G_pad = _round_up(G, 128)
    O_pad = _round_up(O, 128)

    # Fused, pre-transposed gate weights: columns [r | z | n], zero-padded.
    wih_f = jnp.zeros((H, G_pad), jnp.float32).at[:, :G].set(params["w_ih"].T)
    whh_f = jnp.zeros((H, G_pad), jnp.float32).at[:, :G].set(params["w_hh"].T)
    bih = jnp.zeros((1, G_pad), jnp.float32).at[:, :G].set(
        params["b_ih"].reshape(1, G))
    bhh = jnp.zeros((1, G_pad), jnp.float32).at[:, :G].set(
        params["b_hh"].reshape(1, G))
    wdec_t = jnp.zeros((H, O_pad), jnp.float32).at[:, :O].set(params["w_dec"].T)
    bdec = jnp.zeros((1, O_pad), jnp.float32).at[:, :O].set(
        params["b_dec"].reshape(1, O))

    return {
        "embedding": params["embedding"],
        "wih_f": wih_f,
        "whh_f": whh_f,
        "bih": bih,
        "bhh": bhh,
        "wdec_t": wdec_t,
        "bdec": bdec,
        "out_size": O,
    }


def char_rnn_forward_seq(input_ids_seq, hidden, prepared):
    """Run T GRU steps in ONE pallas_call (single grid step for T <= 64).

    input_ids_seq: (T, B) int32 token ids; hidden: (1, B, H) float32.
    Returns (logits (T, B, O), new hidden (1, B, H)).
    """
    emb = prepared["embedding"]
    T, B = input_ids_seq.shape
    H = emb.shape[1]
    O = prepared["out_size"]
    G_pad = prepared["wih_f"].shape[1]
    O_pad = prepared["wdec_t"].shape[1]
    B_pad = _round_up(B, 8)                 # fill sublanes

    TS = T if T <= 64 else 64               # timesteps per grid iteration
    T_pad = _round_up(T, TS)
    num_chunks = T_pad // TS

    # Embedding gather + padding = plain-JAX glue.
    encoded = emb[input_ids_seq]            # (T, B, H)
    x_seq = jnp.zeros((T_pad, B_pad, H), jnp.float32).at[:T, :B, :].set(encoded)
    h0 = jnp.zeros((B_pad, H), jnp.float32).at[:B, :].set(hidden.reshape(B, H))

    kernel = functools.partial(char_rnn_chunk_kernel,
                               hidden_size=H,
                               valid_steps=T,
                               need_mask=(T_pad != T))

    logits_seq, h_out = pl.pallas_call(
        kernel,
        out_shape=(
            jax.ShapeDtypeStruct((T_pad, B_pad, O_pad), jnp.float32),
            jax.ShapeDtypeStruct((B_pad, H), jnp.float32),
        ),
        grid_spec=pltpu.PrefetchScalarGridSpec(
            num_scalar_prefetch=0,
            grid=(num_chunks,),
            in_specs=[
                pl.BlockSpec((TS, B_pad, H), lambda c: (c, 0, 0)),      # x chunk
                pl.BlockSpec((B_pad, H), lambda c: (0, 0)),             # h0
                pl.BlockSpec((H, G_pad), lambda c: (0, 0)),             # W_ih fused (resident)
                pl.BlockSpec((H, G_pad), lambda c: (0, 0)),             # W_hh fused (resident)
                pl.BlockSpec((1, G_pad), lambda c: (0, 0)),             # b_ih (resident)
                pl.BlockSpec((1, G_pad), lambda c: (0, 0)),             # b_hh (resident)
                pl.BlockSpec((H, O_pad), lambda c: (0, 0)),             # W_dec^T (resident)
                pl.BlockSpec((1, O_pad), lambda c: (0, 0)),             # b_dec (resident)
            ],
            out_specs=(
                pl.BlockSpec((TS, B_pad, O_pad), lambda c: (c, 0, 0)),  # logits chunk
                pl.BlockSpec((B_pad, H), lambda c: (0, 0)),             # h (resident carry)
            ),
        ),
        input_output_aliases={1: 1},        # donate h0 buffer to the h output
        compiler_params=pltpu.CompilerParams(
            dimension_semantics=("arbitrary",)),  # hidden carried across chunks
    )(x_seq, h0, prepared["wih_f"], prepared["whh_f"], prepared["bih"],
      prepared["bhh"], prepared["wdec_t"], prepared["bdec"])

    logits = logits_seq[:T, :B, :O]         # strip time/batch/lane padding
    h_new = h_out[:B, :].reshape(1, B, H)
    return logits, h_new


def char_rnn_forward(input_ids, hidden, prepared):
    """Matches CharRNN.forward (single step): input (B,), hidden (1, B, H)."""
    logits_seq, h_new = char_rnn_forward_seq(input_ids[None, :], hidden, prepared)
    return logits_seq[0], h_new


def make_params(key, vocab_size, hidden_size, output_size):
    ks = jax.random.split(key, 7)
    scale = 1.0 / jnp.sqrt(hidden_size)
    return {
        "embedding": jax.random.normal(ks[0], (vocab_size, hidden_size), jnp.float32),
        "w_ih": jax.random.uniform(ks[1], (3 * hidden_size, hidden_size),
                                   jnp.float32, -scale, scale),
        "w_hh": jax.random.uniform(ks[2], (3 * hidden_size, hidden_size),
                                   jnp.float32, -scale, scale),
        "b_ih": jax.random.uniform(ks[3], (1, 3 * hidden_size),
                                   jnp.float32, -scale, scale),
        "b_hh": jax.random.uniform(ks[4], (1, 3 * hidden_size),
                                   jnp.float32, -scale, scale),
        "w_dec": jax.random.uniform(ks[5], (output_size, hidden_size),
                                    jnp.float32, -scale, scale),
        "b_dec": jax.random.uniform(ks[6], (1, output_size),
                                    jnp.float32, -scale, scale),
    }


def reference_forward(input_ids, hidden, params):
    """Pure-JAX single-step reference matching PyTorch GRU + Linear semantics."""
    H = params["embedding"].shape[1]
    x = params["embedding"][input_ids]
    h = hidden.reshape(x.shape[0], H)
    gi = x @ params["w_ih"].T + params["b_ih"]
    gh = h @ params["w_hh"].T + params["b_hh"]
    r = jax.nn.sigmoid(gi[:, :H] + gh[:, :H])
    z = jax.nn.sigmoid(gi[:, H:2 * H] + gh[:, H:2 * H])
    n = jnp.tanh(gi[:, 2 * H:] + r * gh[:, 2 * H:])
    h_new = (1 - z) * n + z * h
    logits = h_new @ params["w_dec"].T + params["b_dec"]
    return logits, h_new.reshape(1, x.shape[0], H)


def reference_forward_seq(input_ids_seq, hidden, params):
    logits_list = []
    h = hidden
    for t in range(input_ids_seq.shape[0]):
        logits, h = reference_forward(input_ids_seq[t], h, params)
        logits_list.append(logits)
    return jnp.stack(logits_list), h


if __name__ == "__main__":
    vocab_size = 65          # input_size == output_size (char vocab)
    hidden_size = 32
    batch = 2
    n_layers = 1
    seq_len = 8

    key = jax.random.PRNGKey(0)
    kp, ki, ks = jax.random.split(key, 3)
    params = make_params(kp, vocab_size, hidden_size, vocab_size)
    prepared = prepare_params(params)        # one-time layout transform

    input_ids = jax.random.randint(ki, (batch,), 0, vocab_size, dtype=jnp.int32)
    hidden = jnp.zeros((n_layers, batch, hidden_size), jnp.float32)  # init_hidden

    # --- single step: matches CharRNN.forward exactly ---
    logits, h_new = char_rnn_forward(input_ids, hidden, prepared)
    logits = jax.block_until_ready(logits)
    h_new = jax.block_until_ready(h_new)

    ref_logits, ref_h = reference_forward(input_ids, hidden, params)
    assert logits.shape == (batch, vocab_size)
    assert h_new.shape == (n_layers, batch, hidden_size)
    assert jnp.allclose(logits, ref_logits, atol=1e-5, rtol=1e-5)
    assert jnp.allclose(h_new, ref_h, atol=1e-5, rtol=1e-5)

    # --- fused multi-step: seq_len GRU steps in ONE pallas_call / grid step ---
    seq_ids = jax.random.randint(ks, (seq_len, batch), 0, vocab_size,
                                 dtype=jnp.int32)
    logits_seq, h_seq = char_rnn_forward_seq(seq_ids, hidden, prepared)
    logits_seq = jax.block_until_ready(logits_seq)
    h_seq = jax.block_until_ready(h_seq)

    ref_logits_seq, ref_h_seq = reference_forward_seq(seq_ids, hidden, params)
    assert logits_seq.shape == (seq_len, batch, vocab_size)
    assert h_seq.shape == (n_layers, batch, hidden_size)
    assert jnp.allclose(logits_seq, ref_logits_seq, atol=1e-5, rtol=1e-5)
    assert jnp.allclose(h_seq, ref_h_seq, atol=1e-5, rtol=1e-5)

    print("KERNEL_OK")
</pallas_src>

<mosaic_0001>
module attributes {stable_mosaic.version = 11 : i64} {
  func.func @char_rnn_chunk_kernel(%arg0: i32, %arg1: memref<1x8x32xf32, #tpu.memory_space<vmem>>, %arg2: memref<8x32xf32, #tpu.memory_space<vmem>>, %arg3: memref<32x128xf32, #tpu.memory_space<vmem>>, %arg4: memref<32x128xf32, #tpu.memory_space<vmem>>, %arg5: memref<1x128xf32, #tpu.memory_space<vmem>>, %arg6: memref<1x128xf32, #tpu.memory_space<vmem>>, %arg7: memref<32x128xf32, #tpu.memory_space<vmem>>, %arg8: memref<1x128xf32, #tpu.memory_space<vmem>>, %arg9: memref<1x8x128xf32, #tpu.memory_space<vmem>>, %arg10: memref<8x32xf32, #tpu.memory_space<vmem>>) attributes {dimension_semantics = [#tpu.dimension_semantics<arbitrary>], iteration_bounds = array<i64: 1>, scalar_prefetch = 0 : i64, scratch_operands = 0 : i64, tpu.core_type = #tpu.core_type<tc>, window_params = [{transform_indices = @transform_0, window_bounds = array<i64: 1, 8, 32>}, {pipeline_mode = #tpu.pipeline_mode<synchronous>, transform_indices = @transform_1, window_bounds = array<i64: 8, 32>}, {pipeline_mode = #tpu.pipeline_mode<synchronous>, transform_indices = @transform_2, window_bounds = array<i64: 32, 128>}, {pipeline_mode = #tpu.pipeline_mode<synchronous>, transform_indices = @transform_3, window_bounds = array<i64: 32, 128>}, {pipeline_mode = #tpu.pipeline_mode<synchronous>, transform_indices = @transform_4, window_bounds = array<i64: 1, 128>}, {pipeline_mode = #tpu.pipeline_mode<synchronous>, transform_indices = @transform_5, window_bounds = array<i64: 1, 128>}, {pipeline_mode = #tpu.pipeline_mode<synchronous>, transform_indices = @transform_6, window_bounds = array<i64: 32, 128>}, {pipeline_mode = #tpu.pipeline_mode<synchronous>, transform_indices = @transform_7, window_bounds = array<i64: 1, 128>}, {transform_indices = @transform_8, window_bounds = array<i64: 1, 8, 128>}, {pipeline_mode = #tpu.pipeline_mode<synchronous>, transform_indices = @transform_9, window_bounds = array<i64: 8, 32>}]} {
    %c0_i32 = arith.constant 0 : i32
    %0 = arith.cmpi eq, %arg0, %c0_i32 : i32
    %1 = arith.extui %0 : i1 to i32
    %c0_i32_0 = arith.constant 0 : i32
    %2 = arith.cmpi ne, %1, %c0_i32_0 : i32
    scf.if %2 {
      %c0_25 = arith.constant 0 : index
      %c0_26 = arith.constant 0 : index
      %50 = vector.load %arg2[%c0_25, %c0_26] : memref<8x32xf32, #tpu.memory_space<vmem>>, vector<8x32xf32>
      %c0_27 = arith.constant 0 : index
      %c0_28 = arith.constant 0 : index
      %51 = vector.load %arg10[%c0_27, %c0_28] : memref<8x32xf32, #tpu.memory_space<vmem>>, vector<8x32xf32>
      tpu.vector_store %arg10[%c0_27, %c0_28], %50 {strides = array<i32>} : memref<8x32xf32, #tpu.memory_space<vmem>>, vector<8x32xf32>,
    } else {
    }
    %c0 = arith.constant 0 : index
    %c0_1 = arith.constant 0 : index
    %3 = vector.load %arg3[%c0, %c0_1] : memref<32x128xf32, #tpu.memory_space<vmem>>, vector<32x128xf32>
    %c0_2 = arith.constant 0 : index
    %c0_3 = arith.constant 0 : index
    %4 = vector.load %arg4[%c0_2, %c0_3] : memref<32x128xf32, #tpu.memory_space<vmem>>, vector<32x128xf32>
    %c0_4 = arith.constant 0 : index
    %c0_5 = arith.constant 0 : index
    %5 = vector.load %arg7[%c0_4, %c0_5] : memref<32x128xf32, #tpu.memory_space<vmem>>, vector<32x128xf32>
    %c0_6 = arith.constant 0 : index
    %c0_7 = arith.constant 0 : index
    %6 = vector.load %arg5[%c0_6, %c0_7] : memref<1x128xf32, #tpu.memory_space<vmem>>, vector<1x128xf32>
    %7 = vector.shape_cast %6 : vector<1x128xf32> to vector<1x128xf32>
    %8 = vector.broadcast %7 : vector<1x128xf32> to vector<8x128xf32>
    %c0_8 = arith.constant 0 : index
    %c0_9 = arith.constant 0 : index
    %9 = vector.load %arg6[%c0_8, %c0_9] : memref<1x128xf32, #tpu.memory_space<vmem>>, vector<1x128xf32>
    %10 = vector.shape_cast %9 : vector<1x128xf32> to vector<1x128xf32>
    %11 = vector.broadcast %10 : vector<1x128xf32> to vector<8x128xf32>
    %c0_10 = arith.constant 0 : index
    %c0_11 = arith.constant 0 : index
    %12 = vector.load %arg8[%c0_10, %c0_11] : memref<1x128xf32, #tpu.memory_space<vmem>>, vector<1x128xf32>
    %13 = vector.shape_cast %12 : vector<1x128xf32> to vector<1x128xf32>
    %14 = vector.broadcast %13 : vector<1x128xf32> to vector<8x128xf32>
    %c0_12 = arith.constant 0 : index
    %c0_13 = arith.constant 0 : index
    %15 = vector.load %arg10[%c0_12, %c0_13] : memref<8x32xf32, #tpu.memory_space<vmem>>, vector<8x32xf32>
    %c0_i32_14 = arith.constant 0 : i32
    %16 = arith.index_cast %c0_i32_14 : i32 to index
    %c0_15 = arith.constant 0 : index
    %c0_16 = arith.constant 0 : index
    %17 = vector.load %arg1[%16, %c0_15, %c0_16] : memref<1x8x32xf32, #tpu.memory_space<vmem>>, vector<1x8x32xf32>
    %18 = vector.shape_cast %17 : vector<1x8x32xf32> to vector<8x32xf32>
    %cst = arith.constant dense<0.000000e+00> : vector<8x128xf32>
    %19 = tpu.matmul %18, %3, %cst {dimension_numbers = #tpu.dot_dimension_numbers<[1], [0], [0], [1], [0, 0, 1, 1], [], []>} : vector<8x32xf32>, vector<32x128xf32>, vector<8x128xf32> -> vector<8x128xf32>
    %20 = arith.addf %19, %8 : vector<8x128xf32>
    %cst_17 = arith.constant dense<0.000000e+00> : vector<8x128xf32>
    %21 = tpu.matmul %15, %4, %cst_17 {dimension_numbers = #tpu.dot_dimension_numbers<[1], [0], [0], [1], [0, 0, 1, 1], [], []>} : vector<8x32xf32>, vector<32x128xf32>, vector<8x128xf32> -> vector<8x128xf32>
    %22 = arith.addf %21, %11 : vector<8x128xf32>
    %23 = vector.extract_strided_slice %20 {offsets = [0, 0], sizes = [8, 64], strides = [1, 1]} : vector<8x128xf32> to vector<8x64xf32>
    %24 = vector.extract_strided_slice %22 {offsets = [0, 0], sizes = [8, 64], strides = [1, 1]} : vector<8x128xf32> to vector<8x64xf32>
    %25 = arith.addf %23, %24 : vector<8x64xf32>
    %26 = arith.negf %25 : vector<8x64xf32>
    %27 = math.exp %26 : vector<8x64xf32>
    %cst_18 = arith.constant 1.000000e+00 : f32
    %28 = vector.broadcast %cst_18 : f32 to vector<8x64xf32>
    %29 = arith.addf %28, %27 : vector<8x64xf32>
    %30 = arith.divf %28, %29 : vector<8x64xf32>
    %31 = vector.extract_strided_slice %30 {offsets = [0, 0], sizes = [8, 32], strides = [1, 1]} : vector<8x64xf32> to vector<8x32xf32>
    %32 = vector.extract_strided_slice %30 {offsets = [0, 32], sizes = [8, 32], strides = [1, 1]} : vector<8x64xf32> to vector<8x32xf32>
    %33 = vector.extract_strided_slice %20 {offsets = [0, 64], sizes = [8, 32], strides = [1, 1]} : vector<8x128xf32> to vector<8x32xf32>
    %34 = vector.extract_strided_slice %22 {offsets = [0, 64], sizes = [8, 32], strides = [1, 1]} : vector<8x128xf32> to vector<8x32xf32>
    %35 = arith.mulf %31, %34 : vector<8x32xf32>
    %36 = arith.addf %33, %35 : vector<8x32xf32>
    %37 = math.tanh %36 : vector<8x32xf32>
    %cst_19 = arith.constant 1.000000e+00 : f32
    %38 = vector.broadcast %cst_19 : f32 to vector<8x32xf32>
    %39 = arith.subf %38, %32 : vector<8x32xf32>
    %40 = arith.mulf %39, %37 : vector<8x32xf32>
    %41 = arith.mulf %32, %15 : vector<8x32xf32>
    %42 = arith.addf %40, %41 : vector<8x32xf32>
    %cst_20 = arith.constant dense<0.000000e+00> : vector<8x128xf32>
    %43 = tpu.matmul %42, %5, %cst_20 {dimension_numbers = #tpu.dot_dimension_numbers<[1], [0], [0], [1], [0, 0, 1, 1], [], []>} : vector<8x32xf32>, vector<32x128xf32>, vector<8x128xf32> -> vector<8x128xf32>
    %44 = arith.addf %43, %14 : vector<8x128xf32>
    %45 = arith.index_cast %c0_i32_14 : i32 to index
    %c0_21 = arith.constant 0 : index
    %c0_22 = arith.constant 0 : index
    %46 = vector.load %arg9[%45, %c0_21, %c0_22] : memref<1x8x128xf32, #tpu.memory_space<vmem>>, vector<1x8x128xf32>
    %47 = vector.shape_cast %46 : vector<1x8x128xf32> to vector<8x128xf32>
    %48 = vector.shape_cast %44 : vector<8x128xf32> to vector<1x8x128xf32>
    tpu.vector_store %arg9[%45, %c0_21, %c0_22], %48 {strides = array<i32>} : memref<1x8x128xf32, #tpu.memory_space<vmem>>, vector<1x8x128xf32>,
    %c1_i32 = arith.constant 1 : i32
    %c0_23 = arith.constant 0 : index
    %c0_24 = arith.constant 0 : index
    %49 = vector.load %arg10[%c0_23, %c0_24] : memref<8x32xf32, #tpu.memory_space<vmem>>, vector<8x32xf32>
    tpu.vector_store %arg10[%c0_23, %c0_24], %42 {strides = array<i32>} : memref<8x32xf32, #tpu.memory_space<vmem>>, vector<8x32xf32>,
    return
  }
  func.func @transform_0(%arg0: i32) -> (i32, i32, i32) {
    %c0_i32 = arith.constant 0 : i32
    %c0_i32_0 = arith.constant 0 : i32
    %c0_i32_1 = arith.constant 0 : i32
    return %arg0, %c0_i32, %c0_i32_0 : i32, i32, i32
  }
  func.func @transform_1(%arg0: i32) -> (i32, i32) {
    %c0_i32 = arith.constant 0 : i32
    %c0_i32_0 = arith.constant 0 : i32
    %c0_i32_1 = arith.constant 0 : i32
    return %c0_i32, %c0_i32_0 : i32, i32
  }
  func.func @transform_2(%arg0: i32) -> (i32, i32) {
    %c0_i32 = arith.constant 0 : i32
    %c0_i32_0 = arith.constant 0 : i32
    %c0_i32_1 = arith.constant 0 : i32
    return %c0_i32, %c0_i32_0 : i32, i32
  }
  func.func @transform_3(%arg0: i32) -> (i32, i32) {
    %c0_i32 = arith.constant 0 : i32
    %c0_i32_0 = arith.constant 0 : i32
    %c0_i32_1 = arith.constant 0 : i32
    return %c0_i32, %c0_i32_0 : i32, i32
  }
  func.func @transform_4(%arg0: i32) -> (i32, i32) {
    %c0_i32 = arith.constant 0 : i32
    %c0_i32_0 = arith.constant 0 : i32
    %c0_i32_1 = arith.constant 0 : i32
    return %c0_i32, %c0_i32_0 : i32, i32
  }
  func.func @transform_5(%arg0: i32) -> (i32, i32) {
    %c0_i32 = arith.constant 0 : i32
    %c0_i32_0 = arith.constant 0 : i32
    %c0_i32_1 = arith.constant 0 : i32
    return %c0_i32, %c0_i32_0 : i32, i32
  }
  func.func @transform_6(%arg0: i32) -> (i32, i32) {
    %c0_i32 = arith.constant 0 : i32
    %c0_i32_0 = arith.constant 0 : i32
    %c0_i32_1 = arith.constant 0 : i32
    return %c0_i32, %c0_i32_0 : i32, i32
  }
  func.func @transform_7(%arg0: i32) -> (i32, i32) {
    %c0_i32 = arith.constant 0 : i32
    %c0_i32_0 = arith.constant 0 : i32
    %c0_i32_1 = arith.constant 0 : i32
    return %c0_i32, %c0_i32_0 : i32, i32
  }
  func.func @transform_8(%arg0: i32) -> (i32, i32, i32) {
    %c0_i32 = arith.constant 0 : i32
    %c0_i32_0 = arith.constant 0 : i32
    %c0_i32_1 = arith.constant 0 : i32
    return %arg0, %c0_i32, %c0_i32_0 : i32, i32, i32
  }
  func.func @transform_9(%arg0: i32) -> (i32, i32) {
    %c0_i32 = arith.constant 0 : i32
    %c0_i32_0 = arith.constant 0 : i32
    %c0_i32_1 = arith.constant 0 : i32
    return %c0_i32, %c0_i32_0 : i32, i32
  }
}

</mosaic_0001>

<llo_original>
// kernel: tpu_custom_call.1
$region0: #{tpu_custom_call.1}
  #allocation0 [shape = 'u32[]', space=smem, size = 0x4, offset = 0x4, fixed_abs, tag = 'smem constant byte address 0x4 - core index']
  #allocation1 [shape = 'u32[144,128]{1,0:T(1,128)}', space=vmem, size = 0x12000, scoped, tag = 'internal scratch']
  %s0 = inlined_call_operand.vmem [shape: f32[1,8,32], index: 0, kind: input, shape index: {}]
  %s1 = inlined_call_operand.hbm [shape: f32[8,32], index: 1, kind: input, shape index: {}, may-alias: {1,9}]
  %s2 = inlined_call_operand.hbm [shape: f32[32,128], index: 2, kind: input, shape index: {}]
  %s3 = inlined_call_operand.hbm [shape: f32[32,128], index: 3, kind: input, shape index: {}]
  %s4 = inlined_call_operand.vmem [shape: f32[1,128], index: 4, kind: input, shape index: {}]
  %s5 = inlined_call_operand.vmem [shape: f32[1,128], index: 5, kind: input, shape index: {}]
  %s6 = inlined_call_operand.hbm [shape: f32[32,128], index: 6, kind: input, shape index: {}]
  %s7 = inlined_call_operand.vmem [shape: f32[1,128], index: 7, kind: input, shape index: {}]
  %s8 = inlined_call_operand.hbm [shape: f32[1,8,128], index: 8, kind: output, shape index: {0}]
  %s9 = inlined_call_operand.hbm [shape: f32[8,32], index: 9, kind: output, shape index: {1}, may-alias: {1,9}]
  %10 = xla_tuple %s8, %s9
  %s11 = sld [smem:[#allocation0]]
  $region70: #{tpu_custom_call.1} parent=0
    _
  %s13 = ssub.s32 1, %s11
  %s14 = scalar_select 0, %s13, %s11
  $region1: #{tpu_custom_call.1} parent=0
    #allocation2 [shape = 'u8[4096]{0}', space=vmem, size = 0x1000, scoped, tag = 'input window, operand 1, single buffered']
    #allocation3 [shape = 's32[1]{0}', space=sflag, size = 0x4, scoped, tag = 'scoped memory for tpu_custom_call.1']
    #allocation4 [shape = 's32[1]{0}', space=sflag, size = 0x4, scoped, tag = 'scoped memory for tpu_custom_call.1']
    #allocation5 [shape = 'u8[16384]{0}', space=vmem, size = 0x4000, scoped, tag = 'input window, operand 2, single buffered']
    #allocation6 [shape = 's32[1]{0}', space=sflag, size = 0x4, scoped, tag = 'scoped memory for tpu_custom_call.1']
    #allocation7 [shape = 'u8[16384]{0}', space=vmem, size = 0x4000, scoped, tag = 'input window, operand 3, single buffered']
    #allocation8 [shape = 'u8[16384]{0}', space=vmem, size = 0x4000, scoped, tag = 'input window, operand 6, single buffered']
    #allocation9 [shape = 's32[1]{0}', space=sflag, size = 0x4, scoped, tag = 'scoped memory for tpu_custom_call.1']
    #allocation10 [shape = 'u8[4096]{0}', space=vmem, size = 0x1000, scoped, tag = 'output window, operand 0, single buffered']
    #allocation11 [shape = 'u8[4096]{0}', space=vmem, size = 0x1000, scoped, tag = 'output window, operand 1, single buffered']
    #allocation12 [shape = 's32[1]{0}', space=sflag, size = 0x4, scoped, tag = 'scoped memory for tpu_custom_call.1']
    %15 = vsyncpa [#allocation3], 0
    %16 = vsyncpa [#allocation6], 0
    %17 = vsyncpa [#allocation9], 0
    %18 = vsyncpa [#allocation4], 0
    %19 = vsyncpa [#allocation12], 0
    // Predicated region
    $region2: #{tpu_custom_call.1} parent=1 // pred_check
      _
    $region3: #{tpu_custom_call.1} parent=1 // pred_check_branch
      %21 = sbr.rel (0) target = $region5
    $region4: #{tpu_custom_call.1} parent=1 // pred_region
      _
    $region5: #{tpu_custom_call.1} parent=1 // pred_fallthru
      _
    // Predicated region
    $region6: #{tpu_custom_call.1} parent=1 // pred_check
      _
    $region7: #{tpu_custom_call.1} parent=1 // pred_check_branch
      %23 = sbr.rel (0) target = $region9
    $region8: #{tpu_custom_call.1} parent=1 // pred_region
      %s25 = ssub.s32 128, 128
      %26 = vsyncadd [#allocation3], %s25
      %s28 = sshll.u32 [#allocation2], 4
      %s29 = int_to_ptr.vmem [resolvable:$true] %s28
      %31 = dma.hbm_to_vmem [thread:$0]  %s1, 128, %s29, [#allocation3]
    $region9: #{tpu_custom_call.1} parent=1 // pred_fallthru
      _
    // Predicated region
    $region10: #{tpu_custom_call.1} parent=1 // pred_check
      _
    $region11: #{tpu_custom_call.1} parent=1 // pred_check_branch
      %33 = sbr.rel (0) target = $region13
    $region12: #{tpu_custom_call.1} parent=1 // pred_region
      %s35 = ssub.s32 512, 512
      %36 = vsyncadd [#allocation6], %s35
      %s37 = sshll.u32 [#allocation5], 4
      %s38 = int_to_ptr.vmem [resolvable:$true] %s37
      %43 = dma.hbm_to_vmem [thread:$0]  %s2, 512, %s38, [#allocation6], 128, 128, 8
    $region13: #{tpu_custom_call.1} parent=1 // pred_fallthru
      _
    // Predicated region
    $region14: #{tpu_custom_call.1} parent=1 // pred_check
      _
    $region15: #{tpu_custom_call.1} parent=1 // pred_check_branch
      %45 = sbr.rel (0) target = $region17
    $region16: #{tpu_custom_call.1} parent=1 // pred_region
      %s47 = ssub.s32 512, 512
      %48 = vsyncadd [#allocation6], %s47
      %s49 = sshll.u32 [#allocation7], 4
      %s50 = int_to_ptr.vmem [resolvable:$true] %s49
      %55 = dma.hbm_to_vmem [thread:$0]  %s3, 512, %s50, [#allocation6], 128, 128, 8
    $region17: #{tpu_custom_call.1} parent=1 // pred_fallthru
      _
    // Predicated region
    $region18: #{tpu_custom_call.1} parent=1 // pred_check
      _
    $region19: #{tpu_custom_call.1} parent=1 // pred_check_branch
      %57 = sbr.rel (0) target = $region21
    $region20: #{tpu_custom_call.1} parent=1 // pred_region
      _
    $region21: #{tpu_custom_call.1} parent=1 // pred_fallthru
      _
    // Predicated region
    $region22: #{tpu_custom_call.1} parent=1 // pred_check
      _
    $region23: #{tpu_custom_call.1} parent=1 // pred_check_branch
      %59 = sbr.rel (0) target = $region25
    $region24: #{tpu_custom_call.1} parent=1 // pred_region
      _
    $region25: #{tpu_custom_call.1} parent=1 // pred_fallthru
      _
    // Predicated region
    $region26: #{tpu_custom_call.1} parent=1 // pred_check
      _
    $region27: #{tpu_custom_call.1} parent=1 // pred_check_branch
      %61 = sbr.rel (0) target = $region29
    $region28: #{tpu_custom_call.1} parent=1 // pred_region
      %s63 = ssub.s32 512, 512
      %64 = vsyncadd [#allocation9], %s63
      %s65 = sshll.u32 [#allocation8], 4
      %s66 = int_to_ptr.vmem [resolvable:$true] %s65
      %71 = dma.hbm_to_vmem [thread:$0]  %s6, 512, %s66, [#allocation9], 128, 128, 8
    $region29: #{tpu_custom_call.1} parent=1 // pred_fallthru
      _
    // Predicated region
    $region30: #{tpu_custom_call.1} parent=1 // pred_check
      _
    $region31: #{tpu_custom_call.1} parent=1 // pred_check_branch
      %73 = sbr.rel (0) target = $region33
    $region32: #{tpu_custom_call.1} parent=1 // pred_region
      _
    $region33: #{tpu_custom_call.1} parent=1 // pred_fallthru
      _
    // Predicated region
    $region34: #{tpu_custom_call.1} parent=1 // pred_check
      _
    $region35: #{tpu_custom_call.1} parent=1 // pred_check_branch
      %75 = sbr.rel (0) target = $region37
    $region36: #{tpu_custom_call.1} parent=1 // pred_region
      %76 = dma.done [#allocation3], 128
    $region37: #{tpu_custom_call.1} parent=1 // pred_fallthru
      _
    // Predicated region
    $region38: #{tpu_custom_call.1} parent=1 // pred_check
      _
    $region39: #{tpu_custom_call.1} parent=1 // pred_check_branch
      %78 = sbr.rel (0) target = $region41
    $region40: #{tpu_custom_call.1} parent=1 // pred_region
      %79 = dma.done [#allocation6], 512
    $region41: #{tpu_custom_call.1} parent=1 // pred_fallthru
      _
    // Predicated region
    $region42: #{tpu_custom_call.1} parent=1 // pred_check
      _
    $region43: #{tpu_custom_call.1} parent=1 // pred_check_branch
      %81 = sbr.rel (0) target = $region45
    $region44: #{tpu_custom_call.1} parent=1 // pred_region
      %82 = dma.done [#allocation6], 512
    $region45: #{tpu_custom_call.1} parent=1 // pred_fallthru
      _
    // Predicated region
    $region46: #{tpu_custom_call.1} parent=1 // pred_check
      _
    $region47: #{tpu_custom_call.1} parent=1 // pred_check_branch
      %84 = sbr.rel (0) target = $region49
    $region48: #{tpu_custom_call.1} parent=1 // pred_region
      %85 = dma.done [#allocation9], 512
    $region49: #{tpu_custom_call.1} parent=1 // pred_fallthru
      _
    %p86 = scmp.eq.s32.totalorder 0, 0
    // Predicated region
    $region50: #{tpu_custom_call.1} parent=1 // pred_check
      %p87 = pneg %p86
    $region51: #{tpu_custom_call.1} parent=1 // pred_check_branch
      %89 = sbr.rel (%p87) target = $region53
    $region52: #{tpu_custom_call.1} parent=1 // pred_region
      %v90 = vld [vmem:[#allocation2] sm:$0xff]
      %vm91 = vcmask 261120
      %92 = vst.msk [vmem:[#allocation11] sm:$0xff] %vm91, %v90
    $region53: #{tpu_custom_call.1} parent=1 // pred_fallthru
      _
    %v93 = vld [vmem:[#allocation5] sm:$0xff]
    %v94 = vld [vmem:[#allocation5 + $0x8] sm:$0xff]
    %v95 = vld [vmem:[#allocation5 + $0x10] sm:$0xff]
    %v96 = vld [vmem:[#allocation5 + $0x18] sm:$0xff]
    %v97 = vld [vmem:[#allocation7] sm:$0xff]
    %v98 = vld [vmem:[#allocation7 + $0x8] sm:$0xff]
    %v99 = vld [vmem:[#allocation7 + $0x10] sm:$0xff]
    %v100 = vld [vmem:[#allocation7 + $0x18] sm:$0xff]
    %v101 = vld [vmem:[#allocation8] sm:$0xff]
    %v102 = vld [vmem:[#allocation8 + $0x8] sm:$0xff]
    %v103 = vld [vmem:[#allocation8 + $0x10] sm:$0xff]
    %v104 = vld [vmem:[#allocation8 + $0x18] sm:$0xff]
    %v105 = vld [vmem:[%s4] sm:$0x1]
    %v107 = vlaneseq
    %v108 = vshrl.u32 %v107, 7
    %v109 = vsub.s32 0, %v108
    %v110 = vrot.slane %v105, %v109
    %v112 = vld [vmem:[%s5] sm:$0x1]
    %v114 = vlaneseq
    %v115 = vshrl.u32 %v114, 7
    %v116 = vsub.s32 0, %v115
    %v117 = vrot.slane %v112, %v116
    %v119 = vld [vmem:[%s7] sm:$0x1]
    %v121 = vlaneseq
    %v122 = vshrl.u32 %v121, 7
    %v123 = vsub.s32 0, %v122
    %v124 = vrot.slane %v119, %v123
    %v126 = vld [vmem:[#allocation11] sm:$0xff]
    %v127 = vld [vmem:[%s0] sm:$0xff]
    %vm128 = vcmask 261120
    %v130 = vsel %vm128, %v127, 0
    %132 = vmatprep.subr.mxu0 0.0
    %133 = vmatpush1.msra.mxu0 0.0
    %134 = vmatprep.subr.mxu0 0.0
    %135 = vmatpush1.msra.mxu0 0.0
    %136 = vmatprep.subr.mxu0 0.0
    %137 = vmatpush1.msra.mxu0 0.0
    %138 = vmatprep.subr.mxu0 0.0
    %139 = vmatpush1.msra.mxu0 0.0
    %140 = vmatprep.subr.mxu0 0.0
    %141 = vmatpush1.msra.mxu0 0.0
    %142 = vmatprep.subr.mxu0 0.0
    %143 = vmatpush1.msra.mxu0 0.0
    %144 = vmatprep.subr.mxu0 0.0
    %145 = vmatpush1.msra.mxu0 0.0
    %146 = vmatprep.subr.mxu0 0.0
    %147 = vmatpush1.msra.mxu0 0.0
    %148 = vmatprep.subr.mxu0 0.0
    %149 = vmatpush1.msra.mxu0 0.0
    %150 = vmatprep.subr.mxu0 0.0
    %151 = vmatpush1.msra.mxu0 0.0
    %152 = vmatprep.subr.mxu0 0.0
    %153 = vmatpush1.msra.mxu0 0.0
    %154 = vmatprep.subr.mxu0 0.0
    %155 = vmatpush1.msra.mxu0 0.0
    %156 = vmatprep.subr.mxu0 0.0
    %157 = vmatpush1.msra.mxu0 %v96
    %158 = vmatprep.subr.mxu0 0.0
    %159 = vmatpush1.msra.mxu0 %v95
    %160 = vmatprep.subr.mxu0 0.0
    %161 = vmatpush1.msra.mxu0 %v94
    %162 = vmatprep.subr.mxu0 0.0
    %163 = vmatpush1.msra.mxu0 %v93
    %164 = vmatprep.subr.mxu0 0.0
    %165 = vmatpush2.msra.mxu0 0.0
    %166 = vmatprep.subr.mxu0 0.0
    %167 = vmatpush2.msra.mxu0 0.0
    %168 = vmatprep.subr.mxu0 0.0
    %169 = vmatpush2.msra.mxu0 0.0
    %170 = vmatprep.subr.mxu0 0.0
    %171 = vmatpush2.msra.mxu0 0.0
    %172 = vmatprep.subr.mxu0 0.0
    %173 = vmatpush2.msra.mxu0 0.0
    %174 = vmatprep.subr.mxu0 0.0
    %175 = vmatpush2.msra.mxu0 0.0
    %176 = vmatprep.subr.mxu0 0.0
    %177 = vmatpush2.msra.mxu0 0.0
    %178 = vmatprep.subr.mxu0 0.0
    %179 = vmatpush2.msra.mxu0 0.0
    %180 = vmatprep.subr.mxu0 0.0
    %181 = vmatpush2.msra.mxu0 0.0
    %182 = vmatprep.subr.mxu0 0.0
    %183 = vmatpush2.msra.mxu0 0.0
    %184 = vmatprep.subr.mxu0 0.0
    %185 = vmatpush2.msra.mxu0 0.0
    %186 = vmatprep.subr.mxu0 0.0
    %187 = vmatpush2.msra.mxu0 0.0
    %188 = vmatprep.subr.mxu0 0.0
    %189 = vmatpush2.msra.mxu0 0.0
    %190 = vmatprep.subr.mxu0 0.0
    %191 = vmatpush2.msra.mxu0 0.0
    %192 = vmatprep.subr.mxu0 0.0
    %193 = vmatpush2.msra.mxu0 0.0
    %194 = vmatprep.subr.mxu0 0.0
    %195 = vmatpush2.msra.mxu0 0.0
    %196 = vmatprep.mubr.f32.mxu0 0.0
    %197 = vmatmul.mubr.f32.gmra.mxu0 %v130
    %v198 = vpop.f32.mrf.mxu0
    %v199 = vadd.f32 %v110, %v198
    %v200 = vpop.f32.mrf.mxu0
    %201 = vdwg.mxu0
    %v203 = vsel %vm128, %v126, 0
    %205 = vmatprep.subr.mxu0 0.0
    %206 = vmatpush1.msra.mxu0 0.0
    %207 = vmatprep.subr.mxu0 0.0
    %208 = vmatpush1.msra.mxu0 0.0
    %209 = vmatprep.subr.mxu0 0.0
    %210 = vmatpush1.msra.mxu0 0.0
    %211 = vmatprep.subr.mxu0 0.0
    %212 = vmatpush1.msra.mxu0 0.0
    %213 = vmatprep.subr.mxu0 0.0
    %214 = vmatpush1.msra.mxu0 0.0
    %215 = vmatprep.subr.mxu0 0.0
    %216 = vmatpush1.msra.mxu0 0.0
    %217 = vmatprep.subr.mxu0 0.0
    %218 = vmatpush1.msra.mxu0 0.0
    %219 = vmatprep.subr.mxu0 0.0
    %220 = vmatpush1.msra.mxu0 0.0
    %221 = vmatprep.subr.mxu0 0.0
    %222 = vmatpush1.msra.mxu0 0.0
    %223 = vmatprep.subr.mxu0 0.0
    %224 = vmatpush1.msra.mxu0 0.0
    %225 = vmatprep.subr.mxu0 0.0
    %226 = vmatpush1.msra.mxu0 0.0
    %227 = vmatprep.subr.mxu0 0.0
    %228 = vmatpush1.msra.mxu0 0.0
    %229 = vmatprep.subr.mxu0 0.0
    %230 = vmatpush1.msra.mxu0 %v100
    %231 = vmatprep.subr.mxu0 0.0
    %232 = vmatpush1.msra.mxu0 %v99
    %233 = vmatprep.subr.mxu0 0.0
    %234 = vmatpush1.msra.mxu0 %v98
    %235 = vmatprep.subr.mxu0 0.0
    %236 = vmatpush1.msra.mxu0 %v97
    %237 = vmatprep.subr.mxu0 0.0
    %238 = vmatpush2.msra.mxu0 0.0
    %239 = vmatprep.subr.mxu0 0.0
    %240 = vmatpush2.msra.mxu0 0.0
    %241 = vmatprep.subr.mxu0 0.0
    %242 = vmatpush2.msra.mxu0 0.0
    %243 = vmatprep.subr.mxu0 0.0
    %244 = vmatpush2.msra.mxu0 0.0
    %245 = vmatprep.subr.mxu0 0.0
    %246 = vmatpush2.msra.mxu0 0.0
    %247 = vmatprep.subr.mxu0 0.0
    %248 = vmatpush2.msra.mxu0 0.0
    %249 = vmatprep.subr.mxu0 0.0
    %250 = vmatpush2.msra.mxu0 0.0
    %251 = vmatprep.subr.mxu0 0.0
    %252 = vmatpush2.msra.mxu0 0.0
    %253 = vmatprep.subr.mxu0 0.0
    %254 = vmatpush2.msra.mxu0 0.0
    %255 = vmatprep.subr.mxu0 0.0
    %256 = vmatpush2.msra.mxu0 0.0
    %257 = vmatprep.subr.mxu0 0.0
    %258 = vmatpush2.msra.mxu0 0.0
    %259 = vmatprep.subr.mxu0 0.0
    %260 = vmatpush2.msra.mxu0 0.0
    %261 = vmatprep.subr.mxu0 0.0
    %262 = vmatpush2.msra.mxu0 0.0
    %263 = vmatprep.subr.mxu0 0.0
    %264 = vmatpush2.msra.mxu0 0.0
    %265 = vmatprep.subr.mxu0 0.0
    %266 = vmatpush2.msra.mxu0 0.0
    %267 = vmatprep.subr.mxu0 0.0
    %268 = vmatpush2.msra.mxu0 0.0
    %269 = vmatprep.mubr.f32.mxu0 0.0
    %270 = vmatmul.mubr.f32.gmra.mxu0 %v203
    %v271 = vpop.f32.mrf.mxu0
    %v272 = vadd.f32 %v117, %v271
    %v273 = vpop.f32.mrf.mxu0
    %274 = vdwg.mxu0
    %v275 = vadd.f32 %v199, %v272
    %v276 = vxor.u32 %v275, 2147483648
    %v277 = vmul.f32 %v276, 1.442695
    %v278 = vpow.pop %v277
    %v279 = vadd.f32 %v278, 1.0
    %v280 = vrcp.pop %v279
    %v281 = vmul.f32 1.0, %v280
    %283 = vrot.lane.b32.xlu0 %v272, 64
    %v284 = vpop.permute.xlu0 %283
    %v286 = vmul.f32 %v281, %v284
    %288 = vrot.lane.b32.xlu0 %v286, 64
    %v289 = vpop.permute.xlu0 %288
    %v291 = vadd.f32 %v199, %v289
    %v292 = vtanh.pop %v291
    %v293 = vsub.f32 1.0, %v281
    %295 = vrot.lane.b32.xlu0 %v292, 96
    %v296 = vpop.permute.xlu0 %295
    %v298 = vmul.f32 %v293, %v296
    %299 = vrot.lane.b32.xlu0 %v126, 32
    %v300 = vpop.permute.xlu0 %299
    %v302 = vmul.f32 %v281, %v300
    %v303 = vadd.f32 %v298, %v302
    %305 = vrot.lane.b32.xlu0 %v303, 96
    %v306 = vpop.permute.xlu0 %305
    %v307 = vsel %vm128, %v306, 0
    %309 = vmatprep.subr.mxu0 0.0
    %310 = vmatpush1.msra.mxu0 0.0
    %311 = vmatprep.subr.mxu0 0.0
    %312 = vmatpush1.msra.mxu0 0.0
    %313 = vmatprep.subr.mxu0 0.0
    %314 = vmatpush1.msra.mxu0 0.0
    %315 = vmatprep.subr.mxu0 0.0
    %316 = vmatpush1.msra.mxu0 0.0
    %317 = vmatprep.subr.mxu0 0.0
    %318 = vmatpush1.msra.mxu0 0.0
    %319 = vmatprep.subr.mxu0 0.0
    %320 = vmatpush1.msra.mxu0 0.0
    %321 = vmatprep.subr.mxu0 0.0
    %322 = vmatpush1.msra.mxu0 0.0
    %323 = vmatprep.subr.mxu0 0.0
    %324 = vmatpush1.msra.mxu0 0.0
    %325 = vmatprep.subr.mxu0 0.0
    %326 = vmatpush1.msra.mxu0 0.0
    %327 = vmatprep.subr.mxu0 0.0
    %328 = vmatpush1.msra.mxu0 0.0
    %329 = vmatprep.subr.mxu0 0.0
    %330 = vmatpush1.msra.mxu0 0.0
    %331 = vmatprep.subr.mxu0 0.0
    %332 = vmatpush1.msra.mxu0 0.0
    %333 = vmatprep.subr.mxu0 0.0
    %334 = vmatpush1.msra.mxu0 %v104
    %335 = vmatprep.subr.mxu0 0.0
    %336 = vmatpush1.msra.mxu0 %v103
    %337 = vmatprep.subr.mxu0 0.0
    %338 = vmatpush1.msra.mxu0 %v102
    %339 = vmatprep.subr.mxu0 0.0
    %340 = vmatpush1.msra.mxu0 %v101
    %341 = vmatprep.subr.mxu0 0.0
    %342 = vmatpush2.msra.mxu0 0.0
    %343 = vmatprep.subr.mxu0 0.0
    %344 = vmatpush2.msra.mxu0 0.0
    %345 = vmatprep.subr.mxu0 0.0
    %346 = vmatpush2.msra.mxu0 0.0
    %347 = vmatprep.subr.mxu0 0.0
    %348 = vmatpush2.msra.mxu0 0.0
    %349 = vmatprep.subr.mxu0 0.0
    %350 = vmatpush2.msra.mxu0 0.0
    %351 = vmatprep.subr.mxu0 0.0
    %352 = vmatpush2.msra.mxu0 0.0
    %353 = vmatprep.subr.mxu0 0.0
    %354 = vmatpush2.msra.mxu0 0.0
    %355 = vmatprep.subr.mxu0 0.0
    %356 = vmatpush2.msra.mxu0 0.0
    %357 = vmatprep.subr.mxu0 0.0
    %358 = vmatpush2.msra.mxu0 0.0
    %359 = vmatprep.subr.mxu0 0.0
    %360 = vmatpush2.msra.mxu0 0.0
    %361 = vmatprep.subr.mxu0 0.0
    %362 = vmatpush2.msra.mxu0 0.0
    %363 = vmatprep.subr.mxu0 0.0
    %364 = vmatpush2.msra.mxu0 0.0
    %365 = vmatprep.subr.mxu0 0.0
    %366 = vmatpush2.msra.mxu0 0.0
    %367 = vmatprep.subr.mxu0 0.0
    %368 = vmatpush2.msra.mxu0 0.0
    %369 = vmatprep.subr.mxu0 0.0
    %370 = vmatpush2.msra.mxu0 0.0
    %371 = vmatprep.subr.mxu0 0.0
    %372 = vmatpush2.msra.mxu0 0.0
    %373 = vmatprep.mubr.f32.mxu0 0.0
    %374 = vmatmul.mubr.f32.gmra.mxu0 %v307
    %v375 = vpop.f32.mrf.mxu0
    %v376 = vadd.f32 %v124, %v375
    %v377 = vpop.f32.mrf.mxu0
    %378 = vdwg.mxu0
    %379 = vst [vmem:[#allocation10] sm:$0xff] %v376
    %381 = vst.msk [vmem:[#allocation11] sm:$0xff] %vm128, %v306
    // Predicated region
    $region54: #{tpu_custom_call.1} parent=1 // pred_check
      _
    $region55: #{tpu_custom_call.1} parent=1 // pred_check_branch
      %383 = sbr.rel (0) target = $region57
    $region56: #{tpu_custom_call.1} parent=1 // pred_region
      %s385 = ssub.s32 128, 128
      %386 = vsyncadd [#allocation4], %s385
      %s388 = sshll.u32 [#allocation10], 4
      %s389 = int_to_ptr.vmem [resolvable:$true] %s388
      %391 = dma.vmem_to_hbm [thread:$0]  %s389, 128, %s8, [#allocation4]
    $region57: #{tpu_custom_call.1} parent=1 // pred_fallthru
      _
    // Predicated region
    $region58: #{tpu_custom_call.1} parent=1 // pred_check
      _
    $region59: #{tpu_custom_call.1} parent=1 // pred_check_branch
      %393 = sbr.rel (0) target = $region61
    $region60: #{tpu_custom_call.1} parent=1 // pred_region
      %s395 = ssub.s32 128, 128
      %396 = vsyncadd [#allocation12], %s395
      %s398 = sshll.u32 [#allocation11], 4
      %s399 = int_to_ptr.vmem [resolvable:$true] %s398
      %401 = dma.vmem_to_hbm [thread:$0]  %s399, 128, %s9, [#allocation12]
    $region61: #{tpu_custom_call.1} parent=1 // pred_fallthru
      _
    // Predicated region
    $region62: #{tpu_custom_call.1} parent=1 // pred_check
      _
    $region63: #{tpu_custom_call.1} parent=1 // pred_check_branch
      %403 = sbr.rel (0) target = $region65
    $region64: #{tpu_custom_call.1} parent=1 // pred_region
      %404 = dma.done [#allocation4], 128
    $region65: #{tpu_custom_call.1} parent=1 // pred_fallthru
      _
    // Predicated region
    $region66: #{tpu_custom_call.1} parent=1 // pred_check
      _
    $region67: #{tpu_custom_call.1} parent=1 // pred_check_branch
      %406 = sbr.rel (0) target = $region69
    $region68: #{tpu_custom_call.1} parent=1 // pred_region
      %407 = dma.done [#allocation12], 128
    $region69: #{tpu_custom_call.1} parent=1 // pred_fallthru
      _
    %408 = vsyncpa [#allocation3], 1
    %409 = vsyncpa [#allocation6], 1
    %410 = vsyncpa [#allocation9], 1
    %411 = vsyncpa [#allocation4], 1
    %412 = vsyncpa [#allocation12], 1

</llo_original>
